<compile_context>
chip_gen: v5e
topology: v5e:2x2
jax: 0.10.0
libtpu: 0.0.40
codegen_flags: <defaults>
</compile_context>

<pallas_src>
import jax
import jax.numpy as jnp
from jax import lax
from jax.experimental import pallas as pl
from jax.experimental.pallas import tpu as pltpu


NUM_JOINTS = 16
VIEW1_NUM = 1
VIEW2_NUM = 3
C_OUT = 128          # n_units of both MIFCNet heads (must be >= n_input of each view)
LN_EPS = 1e-5
BN_EPS = 1e-5
TM_CAP = 1024        # row-tile cap (HBM-bound kernel; VMEM use is ~1.2 MB/step at 1024)


def _round_up(a, m):
    return ((a + m - 1) // m) * m


# ---------------------------------------------------------------------------
# Pallas kernel: fused MIFCNet forward for one (row-tile, view) grid cell
# ---------------------------------------------------------------------------
def _mifc_kernel(x_ref, w1ws_ref, w2_ref, vec_ref, o_ref):
    N = o_ref.shape[-1]
    x = x_ref[...]                                              # (tm, K) bf16
    # One 256-wide MXU pass for [w1_folded | w_shortcut]; split at lane-aligned col N.
    hw = jnp.dot(x, w1ws_ref[...], preferred_element_type=jnp.float32)   # (tm, 2N) f32
    h1 = hw[:, :N] + vec_ref[0:1, :]          # nonlinear branch: (x@W1)*bn_scale + bn_bias
    hs = hw[:, N:] + vec_ref[2:3, :]          # shortcut branch:  x@Ws + bs
    h1 = jnp.maximum(h1, 0.2 * h1)            # LeakyReLU(0.2) -> single vmax
    h = jnp.dot(h1.astype(jnp.bfloat16), w2_ref[...],
                preferred_element_type=jnp.float32) + vec_ref[1:2, :]
    h = h + hs
    # LayerNorm over the feature (lane) axis: two independent cross-lane reductions.
    inv_n = 1.0 / N
    mu = jnp.sum(h, axis=-1, keepdims=True) * inv_n
    ex2 = jnp.sum(h * h, axis=-1, keepdims=True) * inv_n
    var = ex2 - mu * mu
    y = (h - mu) * lax.rsqrt(var + LN_EPS)
    o_ref[...] = (y * vec_ref[3:4, :] + vec_ref[4:5, :]).astype(o_ref.dtype)


def _mifc_pallas(x, w1ws, w2, vec, *, tm):
    """x: (M, K) bf16; w1ws: (V, K, 2N) bf16; w2: (V, N, N) bf16; vec: (V, 8, N) f32
       -> (V, M, N) bf16."""
    M, K = x.shape
    V, _, N = w2.shape
    assert M % tm == 0, (M, tm)
    grid = (M // tm, V)   # V innermost: x row tile is reused across both view steps

    return pl.pallas_call(
        _mifc_kernel,
        out_shape=jax.ShapeDtypeStruct((V, M, N), jnp.bfloat16),
        grid_spec=pltpu.PrefetchScalarGridSpec(
            num_scalar_prefetch=0,
            grid=grid,
            in_specs=[
                pl.BlockSpec((tm, K), lambda i, v: (i, 0)),            # shared x row tile
                pl.BlockSpec((None, K, 2 * N), lambda i, v: (v, 0, 0)),  # [w1|ws] per view
                pl.BlockSpec((None, N, N), lambda i, v: (v, 0, 0)),      # w2 per view
                pl.BlockSpec((None, 8, N), lambda i, v: (v, 0, 0)),      # packed biases/LN
            ],
            out_specs=pl.BlockSpec((None, tm, N), lambda i, v: (v, i, 0)),
        ),
        compiler_params=pltpu.CompilerParams(
            dimension_semantics=("parallel", "parallel")),
    )(x, w1ws, w2, vec)


# ---------------------------------------------------------------------------
# Parameter construction (deterministic, synthetic) — mirrors the PyTorch init
# ---------------------------------------------------------------------------
def make_mifc_params(key, n_input, n_units):
    assert n_units >= n_input          # MIFCNet assertion
    ks = jax.random.split(key, 11)
    w1 = 0.05 * jax.random.normal(ks[0], (n_input, n_units), jnp.float32)
    bn_gamma = 1.0 + 0.1 * jax.random.normal(ks[1], (n_units,), jnp.float32)
    bn_beta = 0.1 * jax.random.normal(ks[2], (n_units,), jnp.float32)
    bn_mean = 0.1 * jax.random.normal(ks[3], (n_units,), jnp.float32)
    bn_var = jnp.abs(jax.random.normal(ks[4], (n_units,), jnp.float32)) + 0.5
    w2 = 0.05 * jax.random.normal(ks[5], (n_units, n_units), jnp.float32)
    b2 = 0.05 * jax.random.normal(ks[6], (n_units,), jnp.float32)
    # shortcut Linear: uniform(-0.01, 0.01) with the eye-mask positions set to 1.0
    ws = jax.random.uniform(ks[7], (n_input, n_units), jnp.float32, -0.01, 0.01)
    ws = ws.at[jnp.arange(n_input), jnp.arange(n_input)].set(1.0)
    bs = 0.01 * jax.random.normal(ks[8], (n_units,), jnp.float32)
    ln_g = 1.0 + 0.1 * jax.random.normal(ks[9], (n_units,), jnp.float32)
    ln_b = 0.1 * jax.random.normal(ks[10], (n_units,), jnp.float32)
    return dict(w1=w1, bn_gamma=bn_gamma, bn_beta=bn_beta, bn_mean=bn_mean,
                bn_var=bn_var, w2=w2, b2=b2, ws=ws, bs=bs, ln_g=ln_g, ln_b=ln_b)


# ---------------------------------------------------------------------------
# One-time weight prep (cached outside the per-call path):
#   fold BN into w1, concat [w1|ws] along N, pack biases/LN params into (8, N)
# ---------------------------------------------------------------------------
def fold_and_pack_params(p1, p2, n_in1, n_in2):
    kpad = _round_up(n_in1 + n_in2, 128)   # both views share one K axis of x_cat

    def fold(p, k_off, k_in):
        scale = p["bn_gamma"] / jnp.sqrt(p["bn_var"] + BN_EPS)
        w1f = p["w1"] * scale[None, :]                    # BN scale folded into weight
        b1f = p["bn_beta"] - p["bn_mean"] * scale         # folded BN bias
        w1p = jnp.zeros((kpad, C_OUT), jnp.float32).at[k_off:k_off + k_in].set(w1f)
        wsp = jnp.zeros((kpad, C_OUT), jnp.float32).at[k_off:k_off + k_in].set(p["ws"])
        w1ws = jnp.concatenate([w1p, wsp], axis=1)        # (kpad, 2*C_OUT)
        vec = jnp.zeros((8, C_OUT), jnp.float32)
        vec = vec.at[0].set(b1f).at[1].set(p["b2"]).at[2].set(p["bs"])
        vec = vec.at[3].set(p["ln_g"]).at[4].set(p["ln_b"])
        return w1ws, p["w2"], vec

    a = fold(p1, 0, n_in1)
    b = fold(p2, n_in1, n_in2)
    return dict(
        w1ws=jnp.stack([a[0], b[0]]).astype(jnp.bfloat16),   # (2, kpad, 2*C_OUT)
        w2=jnp.stack([a[1], b[1]]).astype(jnp.bfloat16),     # (2, C_OUT, C_OUT)
        vec=jnp.stack([a[2], b[2]]).astype(jnp.float32),     # (2, 8, C_OUT)
    )


# ---------------------------------------------------------------------------
# Jitted forward: concat/pad/cast x (one fused copy), one pallas_call
# ---------------------------------------------------------------------------
@jax.jit
def view_discriminator_forward(j1, j2, kp):
    B = j1.shape[0]
    x = jnp.concatenate([j1.reshape(B, -1), j2.reshape(B, -1)], axis=-1)
    kpad = kp["w1ws"].shape[1]
    mpad = _round_up(B, 8)
    if mpad <= TM_CAP:
        tm = mpad
    else:
        tm = TM_CAP
        mpad = _round_up(mpad, tm)
    x = jnp.pad(x, ((0, mpad - B), (0, kpad - x.shape[1]))).astype(jnp.bfloat16)
    out = _mifc_pallas(x, kp["w1ws"], kp["w2"], kp["vec"], tm=tm)   # (2, mpad, N) bf16
    # NOTE: padded rows beyond B hold garbage (LayerNorm of zeros) — always slice [:B].
    return out[0, :B], out[1, :B]


# ---------------------------------------------------------------------------
# Pure-JAX (XLA) reference on the same bf16 kernel-boundary values
# ---------------------------------------------------------------------------
def reference_forward(j1, j2, kp):
    B = j1.shape[0]
    kpad = kp["w1ws"].shape[1]
    N = kp["w2"].shape[-1]
    x = jnp.concatenate([j1.reshape(B, -1), j2.reshape(B, -1)], axis=-1)
    x = jnp.pad(x, ((0, 0), (0, kpad - x.shape[1]))).astype(jnp.bfloat16)
    outs = []
    for v in range(2):
        hw = jnp.dot(x, kp["w1ws"][v], preferred_element_type=jnp.float32)
        h1 = hw[:, :N] + kp["vec"][v, 0:1]
        hs = hw[:, N:] + kp["vec"][v, 2:3]
        h1 = jnp.maximum(h1, 0.2 * h1)
        h = jnp.dot(h1.astype(jnp.bfloat16), kp["w2"][v],
                    preferred_element_type=jnp.float32) + kp["vec"][v, 1:2]
        h = h + hs
        mu = jnp.mean(h, axis=-1, keepdims=True)
        var = jnp.mean(h * h, axis=-1, keepdims=True) - mu * mu
        y = (h - mu) * lax.rsqrt(var + LN_EPS)
        outs.append(y * kp["vec"][v, 3:4] + kp["vec"][v, 4:5])
    return outs[0], outs[1]


if __name__ == "__main__":
    key = jax.random.PRNGKey(0)
    k_j1, k_j2, k_p1, k_p2 = jax.random.split(key, 4)

    B = 2
    n_in1 = VIEW1_NUM * NUM_JOINTS * 2       # 32
    n_in2 = VIEW2_NUM * NUM_JOINTS * 2       # 96
    joints_2d_view1 = jax.random.normal(k_j1, (B, VIEW1_NUM * NUM_JOINTS, 2),
                                        jnp.float32)          # [N, 16, 2]
    joints_2d_view2 = jax.random.normal(k_j2, (B, VIEW2_NUM * NUM_JOINTS, 2),
                                        jnp.float32)          # [N, 3*16, 2]

    p1 = make_mifc_params(k_p1, n_in1, C_OUT)
    p2 = make_mifc_params(k_p2, n_in2, C_OUT)
    kp = fold_and_pack_params(p1, p2, n_in1, n_in2)           # cached weight prep

    s1, s2 = view_discriminator_forward(joints_2d_view1, joints_2d_view2, kp)
    s1 = jax.block_until_ready(s1)
    s2 = jax.block_until_ready(s2)
    assert s1.shape == (B, C_OUT) and s2.shape == (B, C_OUT), (s1.shape, s2.shape)

    r1, r2 = reference_forward(joints_2d_view1, joints_2d_view2, kp)
    r1 = jax.block_until_ready(r1)
    r2 = jax.block_until_ready(r2)
    s1f = s1.astype(jnp.float32)
    s2f = s2.astype(jnp.float32)
    err = max(float(jnp.max(jnp.abs(s1f - r1))), float(jnp.max(jnp.abs(s2f - r2))))
    # Output is bf16 (traffic optimization) -> bf16-level tolerance vs the f32 reference.
    assert jnp.allclose(s1f, r1, rtol=2e-2, atol=3e-2), err
    assert jnp.allclose(s2f, r2, rtol=2e-2, atol=3e-2), err

    print("KERNEL_OK")
</pallas_src>

<mosaic_0001>
module attributes {stable_mosaic.version = 11 : i64} {
  func.func @_mifc_kernel(%arg0: i32, %arg1: i32, %arg2: memref<8x128xbf16, #tpu.memory_space<vmem>>, %arg3: memref<1x128x256xbf16, #tpu.memory_space<vmem>>, %arg4: memref<1x128x128xbf16, #tpu.memory_space<vmem>>, %arg5: memref<1x8x128xf32, #tpu.memory_space<vmem>>, %arg6: memref<1x8x128xbf16, #tpu.memory_space<vmem>>) attributes {dimension_semantics = [#tpu.dimension_semantics<parallel>, #tpu.dimension_semantics<parallel>], iteration_bounds = array<i64: 1, 2>, scalar_prefetch = 0 : i64, scratch_operands = 0 : i64, tpu.core_type = #tpu.core_type<tc>, window_params = [{transform_indices = @transform_0, window_bounds = array<i64: 8, 128>}, {transform_indices = @transform_1, window_bounds = array<i64: 1, 128, 256>}, {transform_indices = @transform_2, window_bounds = array<i64: 1, 128, 128>}, {transform_indices = @transform_3, window_bounds = array<i64: 1, 8, 128>}, {transform_indices = @transform_4, window_bounds = array<i64: 1, 8, 128>}]} {
    %c0 = arith.constant 0 : index
    %c0_0 = arith.constant 0 : index
    %0 = vector.load %arg2[%c0, %c0_0] : memref<8x128xbf16, #tpu.memory_space<vmem>>, vector<8x128xbf16>
    %c0_1 = arith.constant 0 : index
    %c0_2 = arith.constant 0 : index
    %c0_3 = arith.constant 0 : index
    %1 = vector.load %arg3[%c0_1, %c0_2, %c0_3] : memref<1x128x256xbf16, #tpu.memory_space<vmem>>, vector<1x128x256xbf16>
    %2 = vector.shape_cast %1 : vector<1x128x256xbf16> to vector<128x256xbf16>
    %cst = arith.constant dense<0.000000e+00> : vector<8x256xf32>
    %3 = tpu.matmul %0, %2, %cst {dimension_numbers = #tpu.dot_dimension_numbers<[1], [0], [0], [1], [0, 0, 1, 1], [], []>} : vector<8x128xbf16>, vector<128x256xbf16>, vector<8x256xf32> -> vector<8x256xf32>
    %4 = vector.extract_strided_slice %3 {offsets = [0, 0], sizes = [8, 128], strides = [1, 1]} : vector<8x256xf32> to vector<8x128xf32>
    %c0_4 = arith.constant 0 : index
    %c0_5 = arith.constant 0 : index
    %c0_6 = arith.constant 0 : index
    %5 = vector.load %arg5[%c0_4, %c0_5, %c0_6] : memref<1x8x128xf32, #tpu.memory_space<vmem>>, vector<1x1x128xf32>
    %6 = vector.shape_cast %5 : vector<1x1x128xf32> to vector<1x128xf32>
    %7 = vector.broadcast %6 : vector<1x128xf32> to vector<8x128xf32>
    %8 = arith.addf %4, %7 : vector<8x128xf32>
    %9 = vector.extract_strided_slice %3 {offsets = [0, 128], sizes = [8, 128], strides = [1, 1]} : vector<8x256xf32> to vector<8x128xf32>
    %c0_7 = arith.constant 0 : index
    %c2 = arith.constant 2 : index
    %c0_8 = arith.constant 0 : index
    %10 = vector.load %arg5[%c0_7, %c2, %c0_8] : memref<1x8x128xf32, #tpu.memory_space<vmem>>, vector<1x1x128xf32>
    %11 = vector.shape_cast %10 : vector<1x1x128xf32> to vector<1x128xf32>
    %12 = vector.broadcast %11 : vector<1x128xf32> to vector<8x128xf32>
    %13 = arith.addf %9, %12 : vector<8x128xf32>
    %cst_9 = arith.constant 2.000000e-01 : f32
    %14 = vector.broadcast %cst_9 : f32 to vector<8x128xf32>
    %15 = arith.mulf %14, %8 : vector<8x128xf32>
    %16 = arith.maximumf %8, %15 : vector<8x128xf32>
    %17 = arith.truncf %16 : vector<8x128xf32> to vector<8x128xbf16>
    %c0_10 = arith.constant 0 : index
    %c0_11 = arith.constant 0 : index
    %c0_12 = arith.constant 0 : index
    %18 = vector.load %arg4[%c0_10, %c0_11, %c0_12] : memref<1x128x128xbf16, #tpu.memory_space<vmem>>, vector<1x128x128xbf16>
    %19 = vector.shape_cast %18 : vector<1x128x128xbf16> to vector<128x128xbf16>
    %cst_13 = arith.constant dense<0.000000e+00> : vector<8x128xf32>
    %20 = tpu.matmul %17, %19, %cst_13 {dimension_numbers = #tpu.dot_dimension_numbers<[1], [0], [0], [1], [0, 0, 1, 1], [], []>} : vector<8x128xbf16>, vector<128x128xbf16>, vector<8x128xf32> -> vector<8x128xf32>
    %c0_14 = arith.constant 0 : index
    %c1 = arith.constant 1 : index
    %c0_15 = arith.constant 0 : index
    %21 = vector.load %arg5[%c0_14, %c1, %c0_15] : memref<1x8x128xf32, #tpu.memory_space<vmem>>, vector<1x1x128xf32>
    %22 = vector.shape_cast %21 : vector<1x1x128xf32> to vector<1x128xf32>
    %23 = vector.broadcast %22 : vector<1x128xf32> to vector<8x128xf32>
    %24 = arith.addf %20, %23 : vector<8x128xf32>
    %25 = arith.addf %24, %13 : vector<8x128xf32>
    %cst_16 = arith.constant dense<0.000000e+00> : vector<8xf32>
    %26 = vector.multi_reduction <add>, %25, %cst_16 [1] : vector<8x128xf32> to vector<8xf32>
    %27 = vector.shape_cast %26 : vector<8xf32> to vector<8x1xf32>
    %cst_17 = arith.constant 7.812500e-03 : f32
    %28 = vector.broadcast %cst_17 : f32 to vector<8x1xf32>
    %29 = arith.mulf %27, %28 : vector<8x1xf32>
    %30 = arith.mulf %25, %25 : vector<8x128xf32>
    %cst_18 = arith.constant dense<0.000000e+00> : vector<8xf32>
    %31 = vector.multi_reduction <add>, %30, %cst_18 [1] : vector<8x128xf32> to vector<8xf32>
    %32 = vector.shape_cast %31 : vector<8xf32> to vector<8x1xf32>
    %cst_19 = arith.constant 7.812500e-03 : f32
    %33 = vector.broadcast %cst_19 : f32 to vector<8x1xf32>
    %34 = arith.mulf %32, %33 : vector<8x1xf32>
    %35 = arith.mulf %29, %29 : vector<8x1xf32>
    %36 = arith.subf %34, %35 : vector<8x1xf32>
    %37 = vector.broadcast %29 : vector<8x1xf32> to vector<8x128xf32>
    %38 = arith.subf %25, %37 : vector<8x128xf32>
    %cst_20 = arith.constant 9.99999974E-6 : f32
    %39 = vector.broadcast %cst_20 : f32 to vector<8x1xf32>
    %40 = arith.addf %36, %39 : vector<8x1xf32>
    %41 = math.rsqrt %40 : vector<8x1xf32>
    %42 = vector.broadcast %41 : vector<8x1xf32> to vector<8x128xf32>
    %43 = arith.mulf %38, %42 : vector<8x128xf32>
    %c0_21 = arith.constant 0 : index
    %c3 = arith.constant 3 : index
    %c0_22 = arith.constant 0 : index
    %44 = vector.load %arg5[%c0_21, %c3, %c0_22] : memref<1x8x128xf32, #tpu.memory_space<vmem>>, vector<1x1x128xf32>
    %45 = vector.shape_cast %44 : vector<1x1x128xf32> to vector<1x128xf32>
    %46 = vector.broadcast %45 : vector<1x128xf32> to vector<8x128xf32>
    %47 = arith.mulf %43, %46 : vector<8x128xf32>
    %c0_23 = arith.constant 0 : index
    %c4 = arith.constant 4 : index
    %c0_24 = arith.constant 0 : index
    %48 = vector.load %arg5[%c0_23, %c4, %c0_24] : memref<1x8x128xf32, #tpu.memory_space<vmem>>, vector<1x1x128xf32>
    %49 = vector.shape_cast %48 : vector<1x1x128xf32> to vector<1x128xf32>
    %50 = vector.broadcast %49 : vector<1x128xf32> to vector<8x128xf32>
    %51 = arith.addf %47, %50 : vector<8x128xf32>
    %52 = arith.truncf %51 : vector<8x128xf32> to vector<8x128xbf16>
    %c0_25 = arith.constant 0 : index
    %c0_26 = arith.constant 0 : index
    %c0_27 = arith.constant 0 : index
    %53 = vector.load %arg6[%c0_25, %c0_26, %c0_27] : memref<1x8x128xbf16, #tpu.memory_space<vmem>>, vector<1x8x128xbf16>
    %54 = vector.shape_cast %53 : vector<1x8x128xbf16> to vector<8x128xbf16>
    %55 = vector.shape_cast %52 : vector<8x128xbf16> to vector<1x8x128xbf16>
    tpu.vector_store %arg6[%c0_25, %c0_26, %c0_27], %55 {strides = array<i32>} : memref<1x8x128xbf16, #tpu.memory_space<vmem>>, vector<1x8x128xbf16>,
    return
  }
  func.func @transform_0(%arg0: i32, %arg1: i32) -> (i32, i32) {
    %c0_i32 = arith.constant 0 : i32
    %c0_i32_0 = arith.constant 0 : i32
    return %arg0, %c0_i32 : i32, i32
  }
  func.func @transform_1(%arg0: i32, %arg1: i32) -> (i32, i32, i32) {
    %c0_i32 = arith.constant 0 : i32
    %c0_i32_0 = arith.constant 0 : i32
    %c0_i32_1 = arith.constant 0 : i32
    return %arg1, %c0_i32, %c0_i32_0 : i32, i32, i32
  }
  func.func @transform_2(%arg0: i32, %arg1: i32) -> (i32, i32, i32) {
    %c0_i32 = arith.constant 0 : i32
    %c0_i32_0 = arith.constant 0 : i32
    %c0_i32_1 = arith.constant 0 : i32
    return %arg1, %c0_i32, %c0_i32_0 : i32, i32, i32
  }
  func.func @transform_3(%arg0: i32, %arg1: i32) -> (i32, i32, i32) {
    %c0_i32 = arith.constant 0 : i32
    %c0_i32_0 = arith.constant 0 : i32
    %c0_i32_1 = arith.constant 0 : i32
    return %arg1, %c0_i32, %c0_i32_0 : i32, i32, i32
  }
  func.func @transform_4(%arg0: i32, %arg1: i32) -> (i32, i32, i32) {
    %c0_i32 = arith.constant 0 : i32
    %c0_i32_0 = arith.constant 0 : i32
    return %arg1, %arg0, %c0_i32 : i32, i32, i32
  }
}

</mosaic_0001>

<llo_original>
// kernel: view_discriminator_forward.1
$region0: #{view_discriminator_forward.1}
  #allocation0 [shape = 'u32[]', space=smem, size = 0x4, offset = 0x4, fixed_abs, tag = 'smem constant byte address 0x4 - core index']
  #allocation1 [shape = 'u32[72,128]{1,0:T(1,128)}', space=vmem, size = 0x9000, scoped, tag = 'internal scratch']
  %s0 = inlined_call_operand.vmem [shape: bf16[8,128], index: 0, kind: input, shape index: {}]
  %s1 = inlined_call_operand.hbm [shape: bf16[2,128,256], index: 1, kind: input, shape index: {}]
  %s2 = inlined_call_operand.hbm [shape: bf16[2,128,128], index: 2, kind: input, shape index: {}]
  %s3 = inlined_call_operand.vmem [shape: f32[2,8,128], index: 3, kind: input, shape index: {}]
  %s4 = inlined_call_operand.vmem [shape: bf16[2,8,128], index: 4, kind: output, shape index: {}]
  %s5 = sld [smem:[#allocation0]]
  $region57: #{view_discriminator_forward.1} parent=0
    _
  %s7 = ssub.s32 1, %s5
  %s8 = scalar_select 0, %s7, %s5
  $region1: #{view_discriminator_forward.1} parent=0
    #allocation2 [shape = 'u8[131072]{0}', space=vmem, size = 0x20000, scoped, tag = 'input window, operand 1']
    #allocation3 [shape = 's32[2]{0}', space=sflag, size = 0x8, scoped, tag = 'scoped memory for view_discriminator_forward.1']
    #allocation4 [shape = 'u8[65536]{0}', space=vmem, size = 0x10000, scoped, tag = 'input window, operand 2']
    #allocation5 [shape = 's32[2]{0}', space=sflag, size = 0x8, scoped, tag = 'scoped memory for view_discriminator_forward.1']
    %9 = vsyncpa [#allocation3], 0
    %s10 = scalar_lea.sflag [#allocation3], 1
    %11 = vsyncpa %s10, 0
    %12 = vsyncpa [#allocation5], 0
    %s13 = scalar_lea.sflag [#allocation5], 1
    %14 = vsyncpa %s13, 0
    loop: start=0, step=1, limit=4
    $region2: #{view_discriminator_forward.1} parent=1 // loop_pre_header
      _
    $region3: #{view_discriminator_forward.1} parent=1 // loop_header
      %s16 = sphi 0, %s20
      %p17 = scmp.ge.s32.totalorder %s16, 4
      %s23 = sphi 0, %s35
      %s24 = sphi 0, %s31
      %s25 = sphi 0, %s23
      %s26 = sphi 0, %s24
      %s27 = sphi 0, %s25
      %s28 = sphi 0, %s26
      %s38 = sphi 0, %s40
      %s41 = sphi 0, %s38
      %s42 = sphi 0, %s41
      %s58 = sphi 0, %s42
      %s64 = sphi 0, %s66
      %s67 = sphi 0, %s64
      %s68 = sphi 0, %s67
      %s84 = sphi 0, %s68
      %s90 = sphi 0, %s92
      %s93 = sphi 0, %s90
      %s94 = sphi 0, %s93
      %s110 = sphi 0, %s94
      %s116 = sphi 0, %s118
      %s119 = sphi 0, %s116
      %s120 = sphi 0, %s119
      %s136 = sphi 0, %s120
      %s144 = sphi 0, %s146
      %s147 = sphi 0, %s144
      %s148 = sphi 0, %s147
      %s164 = sphi 0, %s148
    $region4: #{view_discriminator_forward.1} parent=1 // loop_header_branch
      %19 = sbr.rel (%p17) target = $region8
    $region5: #{view_discriminator_forward.1} parent=1 // loop_body
      %s21 = ssub.s32 %s16, 1
      %s22 = ssub.s32 %s16, 2
      %s29 = sadd.s32 1, %s24
      %p30 = scmp.ge.s32.totalorder %s29, 2
      %s31 = scalar_select %p30, 0, %s29
      %s32 = sadd.s32 1, %s23
      %s33 = scalar_select %p30, %s32, %s23
      %p34 = scmp.ge.s32.totalorder %s33, 1
      %s35 = scalar_select %p34, 0, %s33
      %s36 = ssub.s32 %s23, %s35
      %p37 = scmp.eq.s32.totalorder %s36, 0
      %s39 = sadd.s32 %s38, 1
      %s40 = scalar_select %p37, %s38, %s39
      %p43 = pneg %p37
      %p44 = scmp.eq.s32.totalorder %s16, 1
      %p45 = por %p43, %p44
      %p46 = scmp.ne.s32.totalorder %s38, %s41
      %p47 = scmp.eq.s32.totalorder %s16, 0
      %p48 = por %p46, %p47
      %p49 = scmp.ne.s32.totalorder %s38, %s41
      %p50 = scmp.eq.s32.totalorder %s21, 1
      %p51 = por %p49, %p50
      %p52 = scmp.ne.s32.totalorder %s41, %s42
      %p53 = scmp.eq.s32.totalorder %s21, 0
      %p54 = por %p52, %p53
      %p55 = scmp.ne.s32.totalorder %s41, %s42
      %p56 = scmp.eq.s32.totalorder %s22, 1
      %p57 = por %p55, %p56
      %p59 = scmp.ne.s32.totalorder %s42, %s58
      %p60 = scmp.eq.s32.totalorder %s22, 0
      %p61 = por %p59, %p60
      %s62 = ssub.s32 %s24, %s31
      %p63 = scmp.eq.s32.totalorder %s62, 0
      %s65 = sadd.s32 %s64, 1
      %s66 = scalar_select %p63, %s64, %s65
      %p69 = pneg %p63
      %p70 = scmp.eq.s32.totalorder %s16, 1
      %p71 = por %p69, %p70
      %p72 = scmp.ne.s32.totalorder %s64, %s67
      %p73 = scmp.eq.s32.totalorder %s16, 0
      %p74 = por %p72, %p73
      %p75 = scmp.ne.s32.totalorder %s64, %s67
      %p76 = scmp.eq.s32.totalorder %s21, 1
      %p77 = por %p75, %p76
      %p78 = scmp.ne.s32.totalorder %s67, %s68
      %p79 = scmp.eq.s32.totalorder %s21, 0
      %p80 = por %p78, %p79
      %p81 = scmp.ne.s32.totalorder %s67, %s68
      %p82 = scmp.eq.s32.totalorder %s22, 1
      %p83 = por %p81, %p82
      %p85 = scmp.ne.s32.totalorder %s68, %s84
      %p86 = scmp.eq.s32.totalorder %s22, 0
      %p87 = por %p85, %p86
      %s88 = ssub.s32 %s24, %s31
      %p89 = scmp.eq.s32.totalorder %s88, 0
      %s91 = sadd.s32 %s90, 1
      %s92 = scalar_select %p89, %s90, %s91
      %p95 = pneg %p89
      %p96 = scmp.eq.s32.totalorder %s16, 1
      %p97 = por %p95, %p96
      %p98 = scmp.ne.s32.totalorder %s90, %s93
      %p99 = scmp.eq.s32.totalorder %s16, 0
      %p100 = por %p98, %p99
      %p101 = scmp.ne.s32.totalorder %s90, %s93
      %p102 = scmp.eq.s32.totalorder %s21, 1
      %p103 = por %p101, %p102
      %p104 = scmp.ne.s32.totalorder %s93, %s94
      %p105 = scmp.eq.s32.totalorder %s21, 0
      %p106 = por %p104, %p105
      %p107 = scmp.ne.s32.totalorder %s93, %s94
      %p108 = scmp.eq.s32.totalorder %s22, 1
      %p109 = por %p107, %p108
      %p111 = scmp.ne.s32.totalorder %s94, %s110
      %p112 = scmp.eq.s32.totalorder %s22, 0
      %p113 = por %p111, %p112
      %s114 = ssub.s32 %s24, %s31
      %p115 = scmp.eq.s32.totalorder %s114, 0
      %s117 = sadd.s32 %s116, 1
      %s118 = scalar_select %p115, %s116, %s117
      %p121 = pneg %p115
      %p122 = scmp.eq.s32.totalorder %s16, 1
      %p123 = por %p121, %p122
      %p124 = scmp.ne.s32.totalorder %s116, %s119
      %p125 = scmp.eq.s32.totalorder %s16, 0
      %p126 = por %p124, %p125
      %p127 = scmp.ne.s32.totalorder %s116, %s119
      %p128 = scmp.eq.s32.totalorder %s21, 1
      %p129 = por %p127, %p128
      %p130 = scmp.ne.s32.totalorder %s119, %s120
      %p131 = scmp.eq.s32.totalorder %s21, 0
      %p132 = por %p130, %p131
      %p133 = scmp.ne.s32.totalorder %s119, %s120
      %p134 = scmp.eq.s32.totalorder %s22, 1
      %p135 = por %p133, %p134
      %p137 = scmp.ne.s32.totalorder %s120, %s136
      %p138 = scmp.eq.s32.totalorder %s22, 0
      %p139 = por %p137, %p138
      %s140 = ssub.s32 %s24, %s31
      %s141 = ssub.s32 %s23, %s35
      %s142 = sor.u32 %s140, %s141
      %p143 = scmp.eq.s32.totalorder %s142, 0
      %s145 = sadd.s32 %s144, 1
      %s146 = scalar_select %p143, %s144, %s145
      %p149 = pneg %p143
      %p150 = scmp.eq.s32.totalorder %s16, 1
      %p151 = por %p149, %p150
      %p152 = scmp.ne.s32.totalorder %s144, %s147
      %p153 = scmp.eq.s32.totalorder %s16, 0
      %p154 = por %p152, %p153
      %p155 = scmp.ne.s32.totalorder %s144, %s147
      %p156 = scmp.eq.s32.totalorder %s21, 1
      %p157 = por %p155, %p156
      %p158 = scmp.ne.s32.totalorder %s147, %s148
      %p159 = scmp.eq.s32.totalorder %s21, 0
      %p160 = por %p158, %p159
      %p161 = scmp.ne.s32.totalorder %s147, %s148
      %p162 = scmp.eq.s32.totalorder %s22, 1
      %p163 = por %p161, %p162
      %p165 = scmp.ne.s32.totalorder %s148, %s164
      %p166 = scmp.eq.s32.totalorder %s22, 0
      %p167 = por %p165, %p166
      %p168 = scmp.le.s32.totalorder 1, %s16
      %p169 = scmp.lt.s32.totalorder %s16, 3
      %p170 = pnand %p168, %p169
      %p171 = pneg %p170
      // Predicated region
      $region9: #{view_discriminator_forward.1} parent=5 // pred_check
        _
      $region10: #{view_discriminator_forward.1} parent=5 // pred_check_branch
        %173 = sbr.rel (%p170) target = $region12
      $region11: #{view_discriminator_forward.1} parent=5 // pred_region
        %s174 = ssub.s32 %s16, 1
        // Predicated region
        $region13: #{view_discriminator_forward.1} parent=11 // pred_check
          %p175 = pneg %p54
        $region14: #{view_discriminator_forward.1} parent=11 // pred_check_branch
          %177 = sbr.rel (%p175) target = $region16
        $region15: #{view_discriminator_forward.1} parent=11 // pred_region
          %p178 = scmp.lt.s32.totalorder %s25, 0
          %s179 = scalar_select %p178, %s25, 0
          %s180 = smul.addr %s179, 4
          %s181 = scalar_lea.vmem %s0, %s180
        $region16: #{view_discriminator_forward.1} parent=11 // pred_fallthru
          _
      $region12: #{view_discriminator_forward.1} parent=5 // pred_fallthru
        _
      %p182 = scmp.lt.s32.totalorder %s16, 2
      // Predicated region
      $region17: #{view_discriminator_forward.1} parent=5 // pred_check
        %p183 = pneg %p182
      $region18: #{view_discriminator_forward.1} parent=5 // pred_check_branch
        %185 = sbr.rel (%p183) target = $region20
      $region19: #{view_discriminator_forward.1} parent=5 // pred_region
        // Predicated region
        $region21: #{view_discriminator_forward.1} parent=19 // pred_check
          %p186 = pneg %p74
        $region22: #{view_discriminator_forward.1} parent=19 // pred_check_branch
          %188 = sbr.rel (%p186) target = $region24
        $region23: #{view_discriminator_forward.1} parent=19 // pred_region
          %s189 = sand.u32 %s64, 1
          %s190 = scalar_lea.sflag [#allocation3], %s189
          %s191 = sand.u32 %s64, 1
          %s192 = smul.addr %s191, 128
          %s193 = scalar_lea.vmem [#allocation2], %s192
          %195 = vsyncadd %s190, 0
          %s196 = smul.addr %s24, 32
          %s197 = smul.addr %s196, 4
          %s198 = scalar_lea.hbm %s1, %s197
          %s199 = sshll.u32 %s198, 4
          %s200 = int_to_ptr.hbm [resolvable:$true] %s199
          %s201 = sshll.u32 %s193, 4
          %s202 = int_to_ptr.vmem [resolvable:$true] %s201
          %207 = dma.hbm_to_vmem [thread:$0]  %s200, 2048, %s202, %s190, 128, 128, 8
        $region24: #{view_discriminator_forward.1} parent=19 // pred_fallthru
          _
        // Predicated region
        $region25: #{view_discriminator_forward.1} parent=19 // pred_check
          %p208 = pneg %p100
        $region26: #{view_discriminator_forward.1} parent=19 // pred_check_branch
          %210 = sbr.rel (%p208) target = $region28
        $region27: #{view_discriminator_forward.1} parent=19 // pred_region
          %s211 = sand.u32 %s90, 1
          %s212 = scalar_lea.sflag [#allocation5], %s211
          %s213 = sand.u32 %s90, 1
          %s214 = smul.addr %s213, 64
          %s215 = scalar_lea.vmem [#allocation4], %s214
          %217 = vsyncadd %s212, 0
          %s218 = smul.addr %s24, 16
          %s219 = smul.addr %s218, 4
          %s220 = scalar_lea.hbm %s2, %s219
          %s221 = sshll.u32 %s220, 4
          %s222 = int_to_ptr.hbm [resolvable:$true] %s221
          %s223 = sshll.u32 %s215, 4
          %s224 = int_to_ptr.vmem [resolvable:$true] %s223
          %229 = dma.hbm_to_vmem [thread:$0]  %s222, 1024, %s224, %s212, 64, 64, 4
        $region28: #{view_discriminator_forward.1} parent=19 // pred_fallthru
          _
        // Predicated region
        $region29: #{view_discriminator_forward.1} parent=19 // pred_check
          %p230 = pneg %p126
        $region30: #{view_discriminator_forward.1} parent=19 // pred_check_branch
          %232 = sbr.rel (%p230) target = $region32
        $region31: #{view_discriminator_forward.1} parent=19 // pred_region
          %p233 = scmp.lt.s32.totalorder %s24, 1
          %s234 = scalar_select %p233, %s24, 1
          %s235 = smul.addr %s234, 8
          %s236 = scalar_lea.vmem %s3, %s235
        $region32: #{view_discriminator_forward.1} parent=19 // pred_fallthru
          _
      $region20: #{view_discriminator_forward.1} parent=5 // pred_fallthru
        _
      %p237 = scmp.le.s32.totalorder 1, %s16
      %p238 = scmp.lt.s32.totalorder %s16, 3
      %p239 = pnand %p237, %p238
      %p240 = pneg %p239
      // Predicated region
      $region33: #{view_discriminator_forward.1} parent=5 // pred_check
        _
      $region34: #{view_discriminator_forward.1} parent=5 // pred_check_branch
        %242 = sbr.rel (%p239) target = $region36
      $region35: #{view_discriminator_forward.1} parent=5 // pred_region
        %s243 = ssub.s32 %s16, 1
        %s244 = sand.u32 %s67, 1
        %s245 = scalar_lea.sflag [#allocation3], %s244
        %s246 = sand.u32 %s67, 1
        %s247 = smul.addr %s246, 128
        %s248 = scalar_lea.vmem [#allocation2], %s247
        // Predicated region
        $region37: #{view_discriminator_forward.1} parent=35 // pred_check
          %p249 = pneg %p80
        $region38: #{view_discriminator_forward.1} parent=35 // pred_check_branch
          %251 = sbr.rel (%p249) target = $region40
        $region39: #{view_discriminator_forward.1} parent=35 // pred_region
          %253 = dma.done %s245, 2048
        $region40: #{view_discriminator_forward.1} parent=35 // pred_fallthru
          _
        %s254 = sand.u32 %s93, 1
        %s255 = scalar_lea.sflag [#allocation5], %s254
        %s256 = sand.u32 %s93, 1
        %s257 = smul.addr %s256, 64
        %s258 = scalar_lea.vmem [#allocation4], %s257
        // Predicated region
        $region41: #{view_discriminator_forward.1} parent=35 // pred_check
          %p259 = pneg %p106
        $region42: #{view_discriminator_forward.1} parent=35 // pred_check_branch
          %261 = sbr.rel (%p259) target = $region44
        $region43: #{view_discriminator_forward.1} parent=35 // pred_region
          %263 = dma.done %s255, 1024
        $region44: #{view_discriminator_forward.1} parent=35 // pred_fallthru
          _
        %p264 = scmp.lt.s32.totalorder %s25, 0
        %s265 = scalar_select %p264, %s25, 0
        %s266 = smul.addr %s265, 4
        %s267 = scalar_lea.vmem %s0, %s266
        %p268 = pneg %p54
        %p269 = pneg %p51
        %s270 = sand.u32 %s67, 1
        %s271 = scalar_lea.sflag [#allocation3], %s270
        %s272 = sand.u32 %s67, 1
        %s273 = smul.addr %s272, 128
        %s274 = scalar_lea.vmem [#allocation2], %s273
        %p275 = pneg %p80
        %p276 = pneg %p77
        %s277 = sand.u32 %s93, 1
        %s278 = scalar_lea.sflag [#allocation5], %s277
        %s279 = sand.u32 %s93, 1
        %s280 = smul.addr %s279, 64
        %s281 = scalar_lea.vmem [#allocation4], %s280
        %p282 = pneg %p106
        %p283 = pneg %p103
        %p284 = scmp.lt.s32.totalorder %s26, 1
        %s285 = scalar_select %p284, %s26, 1
        %s286 = smul.addr %s285, 8
        %s287 = scalar_lea.vmem %s3, %s286
        %p288 = pneg %p132
        %p289 = pneg %p129
        %p290 = pneg %p160
        %p291 = pneg %p157
        %p292 = scmp.lt.s32.totalorder %s26, 1
        %s293 = scalar_select %p292, %s26, 1
        %p294 = scmp.lt.s32.totalorder %s25, 0
        %s295 = scalar_select %p294, %s25, 0
        %s296 = sadd.s32 %s295, %s293
        %s297 = smul.addr %s296, 4
        %s298 = scalar_lea.vmem %s4, %s297
        %p299 = scmp.lt.s32.totalorder %s25, 0
        %s300 = scalar_select %p299, %s25, 0
        %s301 = smul.addr %s300, 4
        %s302 = scalar_lea.vmem %s0, %s301
        %p303 = scmp.lt.s32.totalorder %s26, 1
        %s304 = scalar_select %p303, %s26, 1
        %s305 = smul.addr %s304, 8
        %s306 = scalar_lea.vmem %s3, %s305
        %p307 = scmp.lt.s32.totalorder %s26, 1
        %s308 = scalar_select %p307, %s26, 1
        %p309 = scmp.lt.s32.totalorder %s25, 0
        %s310 = scalar_select %p309, %s25, 0
        %s311 = sadd.s32 %s310, %s308
        %s312 = smul.addr %s311, 4
        %s313 = scalar_lea.vmem %s4, %s312
        %v314 = vld [vmem:[%s302] sm:$0xf]
        %v315 = vld [vmem:[%s248] sm:$0xff]
        %v316 = vld [vmem:[%s248 + $0x8] sm:$0xff]
        %v317 = vld [vmem:[%s248 + $0x10] sm:$0xff]
        %v318 = vld [vmem:[%s248 + $0x18] sm:$0xff]
        %v319 = vld [vmem:[%s248 + $0x20] sm:$0xff]
        %v320 = vld [vmem:[%s248 + $0x28] sm:$0xff]
        %v321 = vld [vmem:[%s248 + $0x30] sm:$0xff]
        %v322 = vld [vmem:[%s248 + $0x38] sm:$0xff]
        %v323 = vld [vmem:[%s248 + $0x40] sm:$0xff]
        %v324 = vld [vmem:[%s248 + $0x48] sm:$0xff]
        %v325 = vld [vmem:[%s248 + $0x50] sm:$0xff]
        %v326 = vld [vmem:[%s248 + $0x58] sm:$0xff]
        %v327 = vld [vmem:[%s248 + $0x60] sm:$0xff]
        %v328 = vld [vmem:[%s248 + $0x68] sm:$0xff]
        %v329 = vld [vmem:[%s248 + $0x70] sm:$0xff]
        %v330 = vld [vmem:[%s248 + $0x78] sm:$0xff]
        %v347 = vunpack.c.l.b16 %v315
        %v348 = vunpack.c.h.b16 %v315
        %v349 = vunpack.c.l.b16 %v316
        %v350 = vunpack.c.h.b16 %v316
        %v351 = vunpack.c.l.b16 %v317
        %v352 = vunpack.c.h.b16 %v317
        %v353 = vunpack.c.l.b16 %v318
        %v354 = vunpack.c.h.b16 %v318
        %v355 = vunpack.c.l.b16 %v319
        %v356 = vunpack.c.h.b16 %v319
        %v357 = vunpack.c.l.b16 %v320
        %v358 = vunpack.c.h.b16 %v320
        %v359 = vunpack.c.l.b16 %v321
        %v360 = vunpack.c.h.b16 %v321
        %v361 = vunpack.c.l.b16 %v322
        %v362 = vunpack.c.h.b16 %v322
        %v363 = vunpack.c.l.b16 %v323
        %v364 = vunpack.c.h.b16 %v323
        %v365 = vunpack.c.l.b16 %v324
        %v366 = vunpack.c.h.b16 %v324
        %v367 = vunpack.c.l.b16 %v325
        %v368 = vunpack.c.h.b16 %v325
        %v369 = vunpack.c.l.b16 %v326
        %v370 = vunpack.c.h.b16 %v326
        %v371 = vunpack.c.l.b16 %v327
        %v372 = vunpack.c.h.b16 %v327
        %v373 = vunpack.c.l.b16 %v328
        %v374 = vunpack.c.h.b16 %v328
        %v375 = vunpack.c.l.b16 %v329
        %v376 = vunpack.c.h.b16 %v329
        %v377 = vunpack.c.l.b16 %v330
        %v378 = vunpack.c.h.b16 %v330
        %v379 = vpack.c.b16 %v349, %v347
        %v380 = vpack.c.b16 %v350, %v348
        %v381 = vpack.c.b16 %v353, %v351
        %v382 = vpack.c.b16 %v354, %v352
        %v383 = vpack.c.b16 %v357, %v355
        %v384 = vpack.c.b16 %v358, %v356
        %v385 = vpack.c.b16 %v361, %v359
        %v386 = vpack.c.b16 %v362, %v360
        %v387 = vpack.c.b16 %v365, %v363
        %v388 = vpack.c.b16 %v366, %v364
        %v389 = vpack.c.b16 %v369, %v367
        %v390 = vpack.c.b16 %v370, %v368
        %v391 = vpack.c.b16 %v373, %v371
        %v392 = vpack.c.b16 %v374, %v372
        %v393 = vpack.c.b16 %v377, %v375
        %v394 = vpack.c.b16 %v378, %v376
        %411 = vmatpush.bf16.msra.mxu0 %v393
        %412 = vmatpush.bf16.msra.mxu0 %v391
        %413 = vmatpush.bf16.msra.mxu0 %v389
        %414 = vmatpush.bf16.msra.mxu0 %v387
        %415 = vmatpush.bf16.msra.mxu0 %v385
        %416 = vmatpush.bf16.msra.mxu0 %v383
        %417 = vmatpush.bf16.msra.mxu0 %v381
        %418 = vmatpush.bf16.msra.mxu0 %v379
        %419 = vmatmul.bf16.gmra.mxu0 %v314
        %v420 = vpop.f32.mrf.mxu0
        %v421 = vadd.f32 0.0, %v420
        %v422 = vpop.f32.mrf.mxu0
        %423 = vdwg.mxu0
        %424 = vmatpush.bf16.msra.mxu0 %v394
        %425 = vmatpush.bf16.msra.mxu0 %v392
        %426 = vmatpush.bf16.msra.mxu0 %v390
        %427 = vmatpush.bf16.msra.mxu0 %v388
        %428 = vmatpush.bf16.msra.mxu0 %v386
        %429 = vmatpush.bf16.msra.mxu0 %v384
        %430 = vmatpush.bf16.msra.mxu0 %v382
        %431 = vmatpush.bf16.msra.mxu0 %v380
        %432 = vmatmul.bf16.gmra.mxu0 %v314
        %v433 = vpop.f32.mrf.mxu0
        %v434 = vadd.f32 0.0, %v433
        %v435 = vpop.f32.mrf.mxu0
        %436 = vdwg.mxu0
        %v437 = vld [vmem:[%s306] sm:$0x1]
        %v438 = vperm.slane %v437, 0
        %v439 = vadd.f32 %v421, %v438
        %v440 = vld [vmem:[%s306 + $0x2] sm:$0x1]
        %v441 = vperm.slane %v440, 0
        %v442 = vadd.f32 %v434, %v441
        %v443 = vmul.f32 %v439, 0.2
        %v444 = vmax.f32 %v439, %v443
        %v445 = vpack.c.bf16 %v444, %v444
        %v446 = vld [vmem:[%s258] sm:$0xf]
        %v447 = vld [vmem:[%s258 + $0x4] sm:$0xf]
        %v448 = vld [vmem:[%s258 + $0x8] sm:$0xf]
        %v449 = vld [vmem:[%s258 + $0xc] sm:$0xf]
        %v450 = vld [vmem:[%s258 + $0x10] sm:$0xf]
        %v451 = vld [vmem:[%s258 + $0x14] sm:$0xf]
        %v452 = vld [vmem:[%s258 + $0x18] sm:$0xf]
        %v453 = vld [vmem:[%s258 + $0x1c] sm:$0xf]
        %v454 = vld [vmem:[%s258 + $0x20] sm:$0xf]
        %v455 = vld [vmem:[%s258 + $0x24] sm:$0xf]
        %v456 = vld [vmem:[%s258 + $0x28] sm:$0xf]
        %v457 = vld [vmem:[%s258 + $0x2c] sm:$0xf]
        %v458 = vld [vmem:[%s258 + $0x30] sm:$0xf]
        %v459 = vld [vmem:[%s258 + $0x34] sm:$0xf]
        %v460 = vld [vmem:[%s258 + $0x38] sm:$0xf]
        %v461 = vld [vmem:[%s258 + $0x3c] sm:$0xf]
        %v462 = vld [vmem:[%s306 + $0x1] sm:$0x1]
        %v463 = vperm.slane %v462, 0
        %v480 = vunpack.c.l.b16 %v446
        %v481 = vunpack.c.l.b16 %v447
        %v482 = vunpack.c.l.b16 %v448
        %v483 = vunpack.c.l.b16 %v449
        %v484 = vunpack.c.l.b16 %v450
        %v485 = vunpack.c.l.b16 %v451
        %v486 = vunpack.c.l.b16 %v452
        %v487 = vunpack.c.l.b16 %v453
        %v488 = vunpack.c.l.b16 %v454
        %v489 = vunpack.c.l.b16 %v455
        %v490 = vunpack.c.l.b16 %v456
        %v491 = vunpack.c.l.b16 %v457
        %v492 = vunpack.c.l.b16 %v458
        %v493 = vunpack.c.l.b16 %v459
        %v494 = vunpack.c.l.b16 %v460
        %v495 = vunpack.c.l.b16 %v461
        %v496 = vpack.c.b16 %v481, %v480
        %v497 = vpack.c.b16 %v483, %v482
        %v498 = vpack.c.b16 %v485, %v484
        %v499 = vpack.c.b16 %v487, %v486
        %v500 = vpack.c.b16 %v489, %v488
        %v501 = vpack.c.b16 %v491, %v490
        %v502 = vpack.c.b16 %v493, %v492
        %v503 = vpack.c.b16 %v495, %v494
        %512 = vmatpush.bf16.msra.mxu0 %v503
        %513 = vmatpush.bf16.msra.mxu0 %v502
        %514 = vmatpush.bf16.msra.mxu0 %v501
        %515 = vmatpush.bf16.msra.mxu0 %v500
        %516 = vmatpush.bf16.msra.mxu0 %v499
        %517 = vmatpush.bf16.msra.mxu0 %v498
        %518 = vmatpush.bf16.msra.mxu0 %v497
        %519 = vmatpush.bf16.msra.mxu0 %v496
        %520 = vmatmul.bf16.gmra.mxu0 %v445
        %v521 = vpop.f32.mrf.mxu0
        %v522 = vadd.f32 %v463, %v521
        %v523 = vpop.f32.mrf.mxu0
        %524 = vdwg.mxu0
        %v525 = vadd.f32 %v522, %v442
        %526 = vadd.xlane.f32.xlu0 %v525
        %v527 = vpop.xlane.xlu0 %526
        %v528 = vmul.f32 %v527, 0.0078125
        %v529 = vmul.f32 %v525, %v525
        %530 = vadd.xlane.f32.xlu0 %v529
        %v531 = vpop.xlane.xlu0 %530
        %v532 = vmul.f32 %v531, 0.0078125
        %v533 = vmul.f32 %v528, %v528
        %v534 = vsub.f32 %v532, %v533
        %v535 = vsub.f32 %v525, %v528
        %v536 = vadd.f32 %v534, 1e-05
        %v537 = vrsqrt.pop %v536
        %v538 = vmul.f32 %v537, %v536
        %v539 = vmul.f32 %v538, %v537
        %v540 = vmul.f32 0.5, %v539
        %v541 = vsub.f32 1.5, %v540
        %v542 = vmul.f32 %v537, %v541
        %vm543 = vweird.f32 %v536
        %vm544 = vweird.f32 %v537
        %vm545 = vmor %vm543, %vm544
        %v546 = vsel %vm545, %v537, %v542
        %v547 = vmul.f32 %v535, %v546
        %v548 = vld [vmem:[%s306 + $0x3] sm:$0x1]
        %v549 = vperm.slane %v548, 0
        %v550 = vmul.f32 %v547, %v549
        %v551 = vld [vmem:[%s306 + $0x4] sm:$0x1]
        %v552 = vperm.slane %v551, 0
        %v553 = vadd.f32 %v550, %v552
        %v554 = vpack.c.bf16 %v553, %v553
        %555 = vst [vmem:[%s313] sm:$0xf] %v554
        %p556 = scmp.lt.s32.totalorder %s26, 1
        %s557 = scalar_select %p556, %s26, 1
        %p558 = scmp.lt.s32.totalorder %s25, 0
        %s559 = scalar_select %p558, %s25, 0
        %s560 = sadd.s32 %s559, %s557
        %s561 = smul.addr %s560, 4
        %s562 = scalar_lea.vmem %s4, %s561
        // Predicated region
        $region45: #{view_discriminator_forward.1} parent=35 // pred_check
          %p563 = pneg %p157
        $region46: #{view_discriminator_forward.1} parent=35 // pred_check_branch
          %565 = sbr.rel (%p563) target = $region48
        $region47: #{view_discriminator_forward.1} parent=35 // pred_region
          _
        $region48: #{view_discriminator_forward.1} parent=35 // pred_fallthru
          _
      $region36: #{view_discriminator_forward.1} parent=5 // pred_fallthru
        _
      %p566 = scmp.le.s32.totalorder 2, %s16
      // Predicated region
      $region49: #{view_discriminator_forward.1} parent=5 // pred_check
        %p567 = pneg %p566
      $region50: #{view_discriminator_forward.1} parent=5 // pred_check_branch
        %569 = sbr.rel (%p567) target = $region52
      $region51: #{view_discriminator_forward.1} parent=5 // pred_region
        %s570 = ssub.s32 %s16, 2
        // Predicated region
        $region53: #{view_discriminator_forward.1} parent=51 // pred_check
          %p571 = pneg %p163
        $region54: #{view_discriminator_forward.1} parent=51 // pred_check_branch
          %573 = sbr.rel (%p571) target = $region56
        $region55: #{view_discriminator_forward.1} parent=51 // pred_region
          %p574 = scmp.lt.s32.totalorder %s28, 1
          %s575 = scalar_select %p574, %s28, 1
          %p576 = scmp.lt.s32.totalorder %s27, 0
          %s577 = scalar_select %p576, %s27, 0
          %s578 = sadd.s32 %s577, %s575
          %s579 = smul.addr %s578, 4
          %s580 = scalar_lea.vmem %s4, %s579
        $region56: #{view_discriminator_forward.1} parent=51 // pred_fallthru
          _
      $region52: #{view_discriminator_forward.1} parent=5 // pred_fallthru
        _
    $region6: #{view_discriminator_forward.1} parent=1 // loop_footer
      %s20 = sadd.s32 1, %s16
    $region7: #{view_discriminator_forward.1} parent=1 // loop_footer_branch
      %15 = sbr.rel target = $region3
    $region8: #{view_discriminator_forward.1} parent=1 // loop_exit
      _
    %581 = vsyncpa [#allocation3], 1
    %s582 = scalar_lea.sflag [#allocation3], 1
    %583 = vsyncpa %s582, 1
    %584 = vsyncpa [#allocation5], 1
    %s585 = scalar_lea.sflag [#allocation5], 1
    %586 = vsyncpa %s585, 1

</llo_original>
